<compile_context>
chip_gen: v7x
topology: tpu7x:2x2x1
jax: 0.10.0
libtpu: 0.0.40
codegen_flags: <defaults>
</compile_context>

<pallas_src>
import functools

import jax
import jax.numpy as jnp
from jax.experimental import pallas as pl
from jax.experimental.pallas import tpu as pltpu

LN_EPS = 1e-5  # PyTorch nn.LayerNorm default


def target_pred_kernel(x_ref, w1_ref, w2_ref, w3_ref, v_ref, out_ref, *,
                       d_in, n_cand):
    """One grid step = Bc batch elements folded onto the candidate/lane axis."""
    H2 = w2_ref.shape[0]          # 2 * hidden_dim
    H = H2 // 2
    L = x_ref.shape[2]            # Bc * n_cand lanes
    Bc = L // n_cand

    x = x_ref[0]                                           # (DP, L) bf16
    mask_row = x[d_in:d_in + 1, :].astype(jnp.float32)     # (1, L) additive mask

    g1, be1 = v_ref[:, 0:1], v_ref[:, 1:2]                 # (2H, 1) f32 each
    b2, g2, be2 = v_ref[:, 2:3], v_ref[:, 3:4], v_ref[:, 4:5]
    b3 = v_ref[0:8, 5:6]                                   # (8, 1) = [pb3, ob3_x, ob3_y, 0...]

    def seg_ln_relu(h, gamma, beta):
        # LayerNorm over the hidden (sublane) axis, separately per head block,
        # using one-pass statistics (var = E[z^2] - mu^2).
        def ln(z):
            mu = jnp.mean(z, axis=0, keepdims=True)
            mu2 = jnp.mean(z * z, axis=0, keepdims=True)
            var = mu2 - mu * mu
            return (z - mu) * jax.lax.rsqrt(var + LN_EPS)
        hn = jnp.concatenate([ln(h[0:H, :]), ln(h[H:H2, :])], axis=0)
        return jnp.maximum(hn * gamma + beta, 0.0)

    # layer 1 (both heads fused); bias folded into the ones-row column of w1
    h = jnp.dot(w1_ref[...], x, preferred_element_type=jnp.float32)         # (2H, L)
    h = seg_ln_relu(h, g1, be1)
    # layer 2 (block-diagonal fusion of both heads)
    h = jnp.dot(w2_ref[...], h.astype(jnp.bfloat16),
                preferred_element_type=jnp.float32) + b2                    # (2H, L)
    h = seg_ln_relu(h, g2, be2)
    # layer 3: row 0 = prob logit, rows 1-2 = offset, rows 3-7 = 0
    y = jnp.dot(w3_ref[...], h.astype(jnp.bfloat16),
                preferred_element_type=jnp.float32) + b3                    # (8, L)

    # masked softmax per batch segment (each n_cand-wide, 128-aligned lane chunk)
    logits = y[0:1, :] + mask_row                                           # (1, L)
    probs = []
    for bc in range(Bc):                      # Bc is small & static -> unrolled
        seg = logits[:, bc * n_cand:(bc + 1) * n_cand]                      # (1, N)
        m = jnp.max(seg, axis=-1, keepdims=True)
        e = jnp.exp(seg - m)
        s = jnp.sum(e, axis=-1, keepdims=True)
        probs.append(e / s)                   # exact reciprocal (top-k parity)
    prob = probs[0] if Bc == 1 else jnp.concatenate(probs, axis=-1)         # (1, L)

    # two lane-dense stores (no iota/where epilogue): row 0 <- prob
    out_ref[0] = y
    out_ref[0, 0:1, :] = prob


def _choose_bc(batch, n_pad, target_lanes=1024):
    """Batch elements per grid step: wide lanes, but keep >= 2 steps (v7x megacore)."""
    bc = max(1, target_lanes // n_pad)
    if batch >= 2:
        bc = min(bc, max(1, batch // 2))
    return max(1, min(bc, batch))


def _pack_params(params, d_in, DP):
    """Pack the 20 TargetPred parameters into 3 bf16 weight slabs + 1 f32 vec slab."""
    H = params["pw1"].shape[1]
    H2 = 2 * H
    f32 = jnp.float32

    # layer-1 (2H, DP): cols 0..d_in-1 = fused transposed weights,
    # col d_in = 0 (mask row must not contribute), col d_in+1 = fused bias (ones row).
    w1t = jnp.concatenate([params["pw1"].T, params["ow1"].T], axis=0).astype(f32)
    b1 = jnp.concatenate([params["pb1"].reshape(-1),
                          params["ob1"].reshape(-1)]).astype(f32)
    w1s = jnp.zeros((H2, DP), f32)
    w1s = w1s.at[:, 0:d_in].set(w1t)
    w1s = w1s.at[:, d_in + 1].set(b1)
    w1s = w1s.astype(jnp.bfloat16)

    # layer-2: block-diagonal (2H, 2H)
    zhh = jnp.zeros((H, H), f32)
    w2s = jnp.concatenate([
        jnp.concatenate([params["pw2"].T.astype(f32), zhh], axis=1),
        jnp.concatenate([zhh, params["ow2"].T.astype(f32)], axis=1),
    ], axis=0).astype(jnp.bfloat16)

    # layer-3 (8, 2H): row 0 = prob head, rows 1-2 = offset head, rows 3-7 = 0
    w3s = jnp.zeros((8, H2), f32)
    w3s = w3s.at[0, 0:H].set(params["pw3"].T.reshape(-1))
    w3s = w3s.at[1:3, H:H2].set(params["ow3"].T)
    w3s = w3s.astype(jnp.bfloat16)

    def cat2(pa, oa):
        return jnp.concatenate([pa.reshape(-1), oa.reshape(-1)]).astype(f32)

    b3 = jnp.concatenate([params["pb3"].reshape(-1), params["ob3"].reshape(-1)])
    b3 = jnp.pad(b3, (0, H2 - b3.shape[0])).astype(f32)
    vslab = jnp.stack([
        cat2(params["pg1"], params["og1"]),
        cat2(params["pbe1"], params["obe1"]),
        cat2(params["pb2"], params["ob2"]),
        cat2(params["pg2"], params["og2"]),
        cat2(params["pbe2"], params["obe2"]),
        b3,
        jnp.zeros((H2,), f32),
        jnp.zeros((H2,), f32),
    ], axis=1)                                                            # (2H, 8)
    return w1s, w2s, w3s, vslab


def target_pred_pallas(feat_in, tar_candidate, mask, params, M):
    B, N, C = feat_in.shape
    d_in = C + 2
    # input rows: [feat ; cand xy ; mask ; ones ; zero pad] -> pad to bf16 16-sublane tile
    DP = -(-(d_in + 2) // 16) * 16
    Npad = -(-N // 128) * 128

    Bc = _choose_bc(B, Npad)
    G = -(-B // Bc)
    Bpad = G * Bc
    L = Bc * Npad
    f32 = jnp.float32

    feat_p, cand_p, mask_p = feat_in, tar_candidate, mask.astype(f32)
    if Npad > N:  # padded candidate lanes must be masked out of the softmax
        feat_p = jnp.pad(feat_p, ((0, 0), (0, Npad - N), (0, 0)))
        cand_p = jnp.pad(cand_p, ((0, 0), (0, Npad - N), (0, 0)))
        mask_p = jnp.pad(mask_p, ((0, 0), (0, Npad - N), (0, 0)),
                         constant_values=-1e9)
    if Bpad > B:
        feat_p = jnp.pad(feat_p, ((0, Bpad - B), (0, 0), (0, 0)))
        cand_p = jnp.pad(cand_p, ((0, Bpad - B), (0, 0), (0, 0)))
        mask_p = jnp.pad(mask_p, ((0, Bpad - B), (0, 0), (0, 0)),
                         constant_values=-1e9)

    # TODO(synk): this transposed/padded slab is an extra HBM copy; producing the
    # lane-major (B, DP, N) bf16 layout upstream would halve total bytes moved.
    x_rows = jnp.swapaxes(jnp.concatenate([feat_p, cand_p], axis=2), 1, 2)   # (Bpad, d_in, Npad)
    mask_row = jnp.swapaxes(mask_p, 1, 2)                                    # (Bpad, 1, Npad)
    ones_row = jnp.ones((Bpad, 1, Npad), f32)
    pad_rows = jnp.zeros((Bpad, DP - d_in - 2, Npad), f32)
    x_t = jnp.concatenate([x_rows, mask_row, ones_row, pad_rows],
                          axis=1).astype(jnp.bfloat16)                       # (Bpad, DP, Npad)

    # fold Bc batch elements onto the lane axis: (G, DP, Bc*Npad)
    x_fold = x_t.reshape(G, Bc, DP, Npad).transpose(0, 2, 1, 3).reshape(G, DP, L)

    w1s, w2s, w3s, vslab = _pack_params(params, d_in, DP)

    kernel = functools.partial(target_pred_kernel, d_in=d_in, n_cand=Npad)
    fused = pl.pallas_call(
        kernel,
        out_shape=jax.ShapeDtypeStruct((G, 8, L), f32),
        grid_spec=pltpu.PrefetchScalarGridSpec(
            num_scalar_prefetch=0,
            grid=(G,),
            in_specs=[
                pl.BlockSpec((1, DP, L), lambda g: (g, 0, 0)),
                pl.BlockSpec(w1s.shape, lambda g: (0, 0)),    # grid-invariant
                pl.BlockSpec(w2s.shape, lambda g: (0, 0)),    # grid-invariant
                pl.BlockSpec(w3s.shape, lambda g: (0, 0)),    # grid-invariant
                pl.BlockSpec(vslab.shape, lambda g: (0, 0)),  # grid-invariant
            ],
            out_specs=pl.BlockSpec((1, 8, L), lambda g: (g, 0, 0)),
        ),
        compiler_params=pltpu.CompilerParams(
            dimension_semantics=("parallel",),      # >= 2 steps -> v7x megacore
        ),
    )(x_fold, w1s, w2s, w3s, vslab)

    # unfold back to (B, 8, N)
    out = fused.reshape(G, 8, Bc, Npad).transpose(0, 2, 1, 3).reshape(Bpad, 8, Npad)
    out = out[:B, :, :N]

    prob_flat = out[:, 0, :]                                    # (B, N)
    tar_prob = prob_flat[..., None]                             # (B, N, 1)
    tar_offset = jnp.swapaxes(out[:, 1:3, :], 1, 2)             # (B, N, 2)

    # TODO(synk): torch.topk + gather has no clean Pallas equivalent; done in plain JAX.
    prob_sel, idx = jax.lax.top_k(prob_flat, M)                 # (B, M)
    prob_selected = prob_sel[..., None]                         # (B, M, 1)
    idx3 = idx[:, :, None]                                      # (B, M, 1)
    tar_selected = (jnp.take_along_axis(tar_candidate, idx3, axis=1)
                    + jnp.take_along_axis(tar_offset, idx3, axis=1))   # (B, M, 2)
    return tar_selected, prob_selected, tar_prob, tar_offset


def make_params(key, in_channels, hidden_dim):
    d_in = in_channels + 2
    ks = jax.random.split(key, 12)

    def lin(k, fan_in, fan_out):
        w = 0.1 * jax.random.normal(k, (fan_in, fan_out), jnp.float32)
        b = jnp.zeros((1, fan_out), jnp.float32)
        return w, b

    params = {}
    params["pw1"], params["pb1"] = lin(ks[0], d_in, hidden_dim)
    params["pg1"], params["pbe1"] = (jnp.ones((1, hidden_dim), jnp.float32),
                                     jnp.zeros((1, hidden_dim), jnp.float32))
    params["pw2"], params["pb2"] = lin(ks[1], hidden_dim, hidden_dim)
    params["pg2"], params["pbe2"] = (jnp.ones((1, hidden_dim), jnp.float32),
                                     jnp.zeros((1, hidden_dim), jnp.float32))
    params["pw3"], params["pb3"] = lin(ks[2], hidden_dim, 1)
    params["ow1"], params["ob1"] = lin(ks[3], d_in, hidden_dim)
    params["og1"], params["obe1"] = (jnp.ones((1, hidden_dim), jnp.float32),
                                     jnp.zeros((1, hidden_dim), jnp.float32))
    params["ow2"], params["ob2"] = lin(ks[4], hidden_dim, hidden_dim)
    params["og2"], params["obe2"] = (jnp.ones((1, hidden_dim), jnp.float32),
                                     jnp.zeros((1, hidden_dim), jnp.float32))
    params["ow3"], params["ob3"] = lin(ks[5], hidden_dim, 2)
    return params


def _layernorm_ref(h, gamma, beta):
    mu = jnp.mean(h, axis=-1, keepdims=True)
    var = jnp.mean((h - mu) ** 2, axis=-1, keepdims=True)
    return (h - mu) * jax.lax.rsqrt(var + LN_EPS) * gamma + beta


def _mlp_ref(x, w1, b1, g1, be1, w2, b2, g2, be2, w3, b3):
    h = jnp.dot(x, w1) + b1
    h = jnp.maximum(_layernorm_ref(h, g1, be1), 0.0)
    h = jnp.dot(h, w2) + b2
    h = jnp.maximum(_layernorm_ref(h, g2, be2), 0.0)
    return jnp.dot(h, w3) + b3


def target_pred_reference(feat_in, tar_candidate, mask, params):
    """Pure-JAX f32 reference of the torch forward (for correctness check)."""
    x = jnp.concatenate([feat_in, tar_candidate], axis=2)
    logits = _mlp_ref(x, params["pw1"], params["pb1"], params["pg1"], params["pbe1"],
                      params["pw2"], params["pb2"], params["pg2"], params["pbe2"],
                      params["pw3"], params["pb3"]) + mask
    tar_prob = jax.nn.softmax(logits, axis=1)
    tar_offset = _mlp_ref(x, params["ow1"], params["ob1"], params["og1"], params["obe1"],
                          params["ow2"], params["ob2"], params["og2"], params["obe2"],
                          params["ow3"], params["ob3"])
    return tar_prob, tar_offset


if __name__ == "__main__":
    # batch, candidates (lane-friendly), in_channels, hidden, top-M
    B, N, C, H, M = 4, 128, 4, 32, 8

    key = jax.random.PRNGKey(0)
    k_feat, k_cand, k_param = jax.random.split(key, 3)

    feat_in = jax.random.normal(k_feat, (B, N, C), jnp.float32)
    tar_candidate = jax.random.normal(k_cand, (B, N, 2), jnp.float32)
    # additive mask: last 4 candidates of each batch masked out
    mask = jnp.zeros((B, N, 1), jnp.float32).at[:, -4:, :].set(-1e9)

    params = make_params(k_param, C, H)

    run = jax.jit(functools.partial(target_pred_pallas, M=M))
    tar_selected, prob_selected, tar_prob, tar_offset = run(
        feat_in, tar_candidate, mask, params)
    jax.block_until_ready((tar_selected, prob_selected, tar_prob, tar_offset))

    # sanity check against pure-JAX f32 reference
    # (bf16 MXU operands -> looser tolerance than 1e-5)
    ref_prob, ref_offset = target_pred_reference(feat_in, tar_candidate, mask, params)
    assert jnp.allclose(tar_prob, ref_prob, atol=3e-2, rtol=3e-2)
    assert jnp.allclose(tar_offset, ref_offset, atol=3e-2, rtol=3e-2)
    assert tar_selected.shape == (B, M, 2)
    assert prob_selected.shape == (B, M, 1)

    print("KERNEL_OK")
</pallas_src>

<mosaic_0001>
module attributes {stable_mosaic.version = 11 : i64} {
  func.func @target_pred_kernel(%arg0: i32, %arg1: memref<1x16x256xbf16, #tpu.memory_space<vmem>>, %arg2: memref<64x16xbf16, #tpu.memory_space<vmem>>, %arg3: memref<64x64xbf16, #tpu.memory_space<vmem>>, %arg4: memref<8x64xbf16, #tpu.memory_space<vmem>>, %arg5: memref<64x8xf32, #tpu.memory_space<vmem>>, %arg6: memref<1x8x256xf32, #tpu.memory_space<vmem>>) attributes {dimension_semantics = [#tpu.dimension_semantics<parallel>], iteration_bounds = array<i64: 2>, scalar_prefetch = 0 : i64, scratch_operands = 0 : i64, tpu.core_type = #tpu.core_type<tc>, window_params = [{transform_indices = @transform_0, window_bounds = array<i64: 1, 16, 256>}, {pipeline_mode = #tpu.pipeline_mode<synchronous>, transform_indices = @transform_1, window_bounds = array<i64: 64, 16>}, {pipeline_mode = #tpu.pipeline_mode<synchronous>, transform_indices = @transform_2, window_bounds = array<i64: 64, 64>}, {pipeline_mode = #tpu.pipeline_mode<synchronous>, transform_indices = @transform_3, window_bounds = array<i64: 8, 64>}, {pipeline_mode = #tpu.pipeline_mode<synchronous>, transform_indices = @transform_4, window_bounds = array<i64: 64, 8>}, {transform_indices = @transform_5, window_bounds = array<i64: 1, 8, 256>}]} {
    %c0 = arith.constant 0 : index
    %c0_0 = arith.constant 0 : index
    %c0_1 = arith.constant 0 : index
    %0 = vector.load %arg1[%c0, %c0_0, %c0_1] : memref<1x16x256xbf16, #tpu.memory_space<vmem>>, vector<1x16x256xbf16>
    %1 = vector.shape_cast %0 : vector<1x16x256xbf16> to vector<16x256xbf16>
    %2 = vector.extract_strided_slice %1 {offsets = [6, 0], sizes = [1, 256], strides = [1, 1]} : vector<16x256xbf16> to vector<1x256xbf16>
    %3 = arith.extf %2 : vector<1x256xbf16> to vector<1x256xf32>
    %c0_2 = arith.constant 0 : index
    %c0_3 = arith.constant 0 : index
    %4 = vector.load %arg5[%c0_2, %c0_3] : memref<64x8xf32, #tpu.memory_space<vmem>>, vector<64x1xf32>
    %c0_4 = arith.constant 0 : index
    %c1 = arith.constant 1 : index
    %5 = vector.load %arg5[%c0_4, %c1] : memref<64x8xf32, #tpu.memory_space<vmem>>, vector<64x1xf32>
    %c0_5 = arith.constant 0 : index
    %c2 = arith.constant 2 : index
    %6 = vector.load %arg5[%c0_5, %c2] : memref<64x8xf32, #tpu.memory_space<vmem>>, vector<64x1xf32>
    %c0_6 = arith.constant 0 : index
    %c3 = arith.constant 3 : index
    %7 = vector.load %arg5[%c0_6, %c3] : memref<64x8xf32, #tpu.memory_space<vmem>>, vector<64x1xf32>
    %c0_7 = arith.constant 0 : index
    %c4 = arith.constant 4 : index
    %8 = vector.load %arg5[%c0_7, %c4] : memref<64x8xf32, #tpu.memory_space<vmem>>, vector<64x1xf32>
    %c0_8 = arith.constant 0 : index
    %c5 = arith.constant 5 : index
    %9 = vector.load %arg5[%c0_8, %c5] : memref<64x8xf32, #tpu.memory_space<vmem>>, vector<8x1xf32>
    %c0_9 = arith.constant 0 : index
    %c0_10 = arith.constant 0 : index
    %10 = vector.load %arg2[%c0_9, %c0_10] : memref<64x16xbf16, #tpu.memory_space<vmem>>, vector<64x16xbf16>
    %cst = arith.constant dense<0.000000e+00> : vector<64x256xf32>
    %11 = tpu.matmul %10, %1, %cst {dimension_numbers = #tpu.dot_dimension_numbers<[1], [0], [0], [1], [0, 0, 1, 1], [], []>} : vector<64x16xbf16>, vector<16x256xbf16>, vector<64x256xf32> -> vector<64x256xf32>
    %12 = vector.extract_strided_slice %11 {offsets = [0, 0], sizes = [32, 256], strides = [1, 1]} : vector<64x256xf32> to vector<32x256xf32>
    %cst_11 = arith.constant dense<0.000000e+00> : vector<256xf32>
    %13 = vector.multi_reduction <add>, %12, %cst_11 [0] : vector<32x256xf32> to vector<256xf32>
    %14 = vector.shape_cast %13 : vector<256xf32> to vector<1x256xf32>
    %cst_12 = arith.constant 3.200000e+01 : f32
    %15 = vector.broadcast %cst_12 : f32 to vector<1x256xf32>
    %16 = arith.divf %14, %15 : vector<1x256xf32>
    %17 = arith.mulf %12, %12 : vector<32x256xf32>
    %cst_13 = arith.constant dense<0.000000e+00> : vector<256xf32>
    %18 = vector.multi_reduction <add>, %17, %cst_13 [0] : vector<32x256xf32> to vector<256xf32>
    %19 = vector.shape_cast %18 : vector<256xf32> to vector<1x256xf32>
    %cst_14 = arith.constant 3.200000e+01 : f32
    %20 = vector.broadcast %cst_14 : f32 to vector<1x256xf32>
    %21 = arith.divf %19, %20 : vector<1x256xf32>
    %22 = arith.mulf %16, %16 : vector<1x256xf32>
    %23 = arith.subf %21, %22 : vector<1x256xf32>
    %24 = vector.broadcast %16 : vector<1x256xf32> to vector<32x256xf32>
    %25 = arith.subf %12, %24 : vector<32x256xf32>
    %cst_15 = arith.constant 9.99999974E-6 : f32
    %26 = vector.broadcast %cst_15 : f32 to vector<1x256xf32>
    %27 = arith.addf %23, %26 : vector<1x256xf32>
    %28 = math.rsqrt %27 : vector<1x256xf32>
    %29 = vector.broadcast %28 : vector<1x256xf32> to vector<32x256xf32>
    %30 = arith.mulf %25, %29 : vector<32x256xf32>
    %31 = vector.extract_strided_slice %11 {offsets = [32, 0], sizes = [32, 256], strides = [1, 1]} : vector<64x256xf32> to vector<32x256xf32>
    %cst_16 = arith.constant dense<0.000000e+00> : vector<256xf32>
    %32 = vector.multi_reduction <add>, %31, %cst_16 [0] : vector<32x256xf32> to vector<256xf32>
    %33 = vector.shape_cast %32 : vector<256xf32> to vector<1x256xf32>
    %cst_17 = arith.constant 3.200000e+01 : f32
    %34 = vector.broadcast %cst_17 : f32 to vector<1x256xf32>
    %35 = arith.divf %33, %34 : vector<1x256xf32>
    %36 = arith.mulf %31, %31 : vector<32x256xf32>
    %cst_18 = arith.constant dense<0.000000e+00> : vector<256xf32>
    %37 = vector.multi_reduction <add>, %36, %cst_18 [0] : vector<32x256xf32> to vector<256xf32>
    %38 = vector.shape_cast %37 : vector<256xf32> to vector<1x256xf32>
    %cst_19 = arith.constant 3.200000e+01 : f32
    %39 = vector.broadcast %cst_19 : f32 to vector<1x256xf32>
    %40 = arith.divf %38, %39 : vector<1x256xf32>
    %41 = arith.mulf %35, %35 : vector<1x256xf32>
    %42 = arith.subf %40, %41 : vector<1x256xf32>
    %43 = vector.broadcast %35 : vector<1x256xf32> to vector<32x256xf32>
    %44 = arith.subf %31, %43 : vector<32x256xf32>
    %cst_20 = arith.constant 9.99999974E-6 : f32
    %45 = vector.broadcast %cst_20 : f32 to vector<1x256xf32>
    %46 = arith.addf %42, %45 : vector<1x256xf32>
    %47 = math.rsqrt %46 : vector<1x256xf32>
    %48 = vector.broadcast %47 : vector<1x256xf32> to vector<32x256xf32>
    %49 = arith.mulf %44, %48 : vector<32x256xf32>
    %50 = tpu.concatenate %30, %49 in 0 : vector<32x256xf32>, vector<32x256xf32> -> vector<64x256xf32>
    %51 = vector.broadcast %4 : vector<64x1xf32> to vector<64x256xf32>
    %52 = arith.mulf %50, %51 : vector<64x256xf32>
    %53 = vector.broadcast %5 : vector<64x1xf32> to vector<64x256xf32>
    %54 = arith.addf %52, %53 : vector<64x256xf32>
    %cst_21 = arith.constant 0.000000e+00 : f32
    %55 = vector.broadcast %cst_21 : f32 to vector<64x256xf32>
    %56 = arith.maximumf %54, %55 : vector<64x256xf32>
    %c0_22 = arith.constant 0 : index
    %c0_23 = arith.constant 0 : index
    %57 = vector.load %arg3[%c0_22, %c0_23] : memref<64x64xbf16, #tpu.memory_space<vmem>>, vector<64x64xbf16>
    %58 = arith.truncf %56 : vector<64x256xf32> to vector<64x256xbf16>
    %cst_24 = arith.constant dense<0.000000e+00> : vector<64x256xf32>
    %59 = tpu.matmul %57, %58, %cst_24 {dimension_numbers = #tpu.dot_dimension_numbers<[1], [0], [0], [1], [0, 0, 1, 1], [], []>} : vector<64x64xbf16>, vector<64x256xbf16>, vector<64x256xf32> -> vector<64x256xf32>
    %60 = vector.broadcast %6 : vector<64x1xf32> to vector<64x256xf32>
    %61 = arith.addf %59, %60 : vector<64x256xf32>
    %62 = vector.extract_strided_slice %61 {offsets = [0, 0], sizes = [32, 256], strides = [1, 1]} : vector<64x256xf32> to vector<32x256xf32>
    %cst_25 = arith.constant dense<0.000000e+00> : vector<256xf32>
    %63 = vector.multi_reduction <add>, %62, %cst_25 [0] : vector<32x256xf32> to vector<256xf32>
    %64 = vector.shape_cast %63 : vector<256xf32> to vector<1x256xf32>
    %cst_26 = arith.constant 3.200000e+01 : f32
    %65 = vector.broadcast %cst_26 : f32 to vector<1x256xf32>
    %66 = arith.divf %64, %65 : vector<1x256xf32>
    %67 = arith.mulf %62, %62 : vector<32x256xf32>
    %cst_27 = arith.constant dense<0.000000e+00> : vector<256xf32>
    %68 = vector.multi_reduction <add>, %67, %cst_27 [0] : vector<32x256xf32> to vector<256xf32>
    %69 = vector.shape_cast %68 : vector<256xf32> to vector<1x256xf32>
    %cst_28 = arith.constant 3.200000e+01 : f32
    %70 = vector.broadcast %cst_28 : f32 to vector<1x256xf32>
    %71 = arith.divf %69, %70 : vector<1x256xf32>
    %72 = arith.mulf %66, %66 : vector<1x256xf32>
    %73 = arith.subf %71, %72 : vector<1x256xf32>
    %74 = vector.broadcast %66 : vector<1x256xf32> to vector<32x256xf32>
    %75 = arith.subf %62, %74 : vector<32x256xf32>
    %cst_29 = arith.constant 9.99999974E-6 : f32
    %76 = vector.broadcast %cst_29 : f32 to vector<1x256xf32>
    %77 = arith.addf %73, %76 : vector<1x256xf32>
    %78 = math.rsqrt %77 : vector<1x256xf32>
    %79 = vector.broadcast %78 : vector<1x256xf32> to vector<32x256xf32>
    %80 = arith.mulf %75, %79 : vector<32x256xf32>
    %81 = vector.extract_strided_slice %61 {offsets = [32, 0], sizes = [32, 256], strides = [1, 1]} : vector<64x256xf32> to vector<32x256xf32>
    %cst_30 = arith.constant dense<0.000000e+00> : vector<256xf32>
    %82 = vector.multi_reduction <add>, %81, %cst_30 [0] : vector<32x256xf32> to vector<256xf32>
    %83 = vector.shape_cast %82 : vector<256xf32> to vector<1x256xf32>
    %cst_31 = arith.constant 3.200000e+01 : f32
    %84 = vector.broadcast %cst_31 : f32 to vector<1x256xf32>
    %85 = arith.divf %83, %84 : vector<1x256xf32>
    %86 = arith.mulf %81, %81 : vector<32x256xf32>
    %cst_32 = arith.constant dense<0.000000e+00> : vector<256xf32>
    %87 = vector.multi_reduction <add>, %86, %cst_32 [0] : vector<32x256xf32> to vector<256xf32>
    %88 = vector.shape_cast %87 : vector<256xf32> to vector<1x256xf32>
    %cst_33 = arith.constant 3.200000e+01 : f32
    %89 = vector.broadcast %cst_33 : f32 to vector<1x256xf32>
    %90 = arith.divf %88, %89 : vector<1x256xf32>
    %91 = arith.mulf %85, %85 : vector<1x256xf32>
    %92 = arith.subf %90, %91 : vector<1x256xf32>
    %93 = vector.broadcast %85 : vector<1x256xf32> to vector<32x256xf32>
    %94 = arith.subf %81, %93 : vector<32x256xf32>
    %cst_34 = arith.constant 9.99999974E-6 : f32
    %95 = vector.broadcast %cst_34 : f32 to vector<1x256xf32>
    %96 = arith.addf %92, %95 : vector<1x256xf32>
    %97 = math.rsqrt %96 : vector<1x256xf32>
    %98 = vector.broadcast %97 : vector<1x256xf32> to vector<32x256xf32>
    %99 = arith.mulf %94, %98 : vector<32x256xf32>
    %100 = tpu.concatenate %80, %99 in 0 : vector<32x256xf32>, vector<32x256xf32> -> vector<64x256xf32>
    %101 = vector.broadcast %7 : vector<64x1xf32> to vector<64x256xf32>
    %102 = arith.mulf %100, %101 : vector<64x256xf32>
    %103 = vector.broadcast %8 : vector<64x1xf32> to vector<64x256xf32>
    %104 = arith.addf %102, %103 : vector<64x256xf32>
    %cst_35 = arith.constant 0.000000e+00 : f32
    %105 = vector.broadcast %cst_35 : f32 to vector<64x256xf32>
    %106 = arith.maximumf %104, %105 : vector<64x256xf32>
    %c0_36 = arith.constant 0 : index
    %c0_37 = arith.constant 0 : index
    %107 = vector.load %arg4[%c0_36, %c0_37] : memref<8x64xbf16, #tpu.memory_space<vmem>>, vector<8x64xbf16>
    %108 = arith.truncf %106 : vector<64x256xf32> to vector<64x256xbf16>
    %cst_38 = arith.constant dense<0.000000e+00> : vector<8x256xf32>
    %109 = tpu.matmul %107, %108, %cst_38 {dimension_numbers = #tpu.dot_dimension_numbers<[1], [0], [0], [1], [0, 0, 1, 1], [], []>} : vector<8x64xbf16>, vector<64x256xbf16>, vector<8x256xf32> -> vector<8x256xf32>
    %110 = vector.broadcast %9 : vector<8x1xf32> to vector<8x256xf32>
    %111 = arith.addf %109, %110 : vector<8x256xf32>
    %112 = vector.extract_strided_slice %111 {offsets = [0, 0], sizes = [1, 256], strides = [1, 1]} : vector<8x256xf32> to vector<1x256xf32>
    %113 = arith.addf %112, %3 : vector<1x256xf32>
    %114 = vector.extract_strided_slice %113 {offsets = [0, 0], sizes = [1, 128], strides = [1, 1]} : vector<1x256xf32> to vector<1x128xf32>
    %cst_39 = arith.constant dense<0xFF800000> : vector<1xf32>
    %115 = vector.multi_reduction <maximumf>, %114, %cst_39 [1] : vector<1x128xf32> to vector<1xf32>
    %116 = vector.shape_cast %115 : vector<1xf32> to vector<1x1xf32>
    %117 = vector.broadcast %116 : vector<1x1xf32> to vector<1x128xf32>
    %118 = arith.subf %114, %117 : vector<1x128xf32>
    %119 = math.exp %118 : vector<1x128xf32>
    %cst_40 = arith.constant dense<0.000000e+00> : vector<1xf32>
    %120 = vector.multi_reduction <add>, %119, %cst_40 [1] : vector<1x128xf32> to vector<1xf32>
    %121 = vector.shape_cast %120 : vector<1xf32> to vector<1x1xf32>
    %122 = vector.broadcast %121 : vector<1x1xf32> to vector<1x128xf32>
    %123 = arith.divf %119, %122 : vector<1x128xf32>
    %124 = vector.extract_strided_slice %113 {offsets = [0, 128], sizes = [1, 128], strides = [1, 1]} : vector<1x256xf32> to vector<1x128xf32>
    %cst_41 = arith.constant dense<0xFF800000> : vector<1xf32>
    %125 = vector.multi_reduction <maximumf>, %124, %cst_41 [1] : vector<1x128xf32> to vector<1xf32>
    %126 = vector.shape_cast %125 : vector<1xf32> to vector<1x1xf32>
    %127 = vector.broadcast %126 : vector<1x1xf32> to vector<1x128xf32>
    %128 = arith.subf %124, %127 : vector<1x128xf32>
    %129 = math.exp %128 : vector<1x128xf32>
    %cst_42 = arith.constant dense<0.000000e+00> : vector<1xf32>
    %130 = vector.multi_reduction <add>, %129, %cst_42 [1] : vector<1x128xf32> to vector<1xf32>
    %131 = vector.shape_cast %130 : vector<1xf32> to vector<1x1xf32>
    %132 = vector.broadcast %131 : vector<1x1xf32> to vector<1x128xf32>
    %133 = arith.divf %129, %132 : vector<1x128xf32>
    %134 = tpu.concatenate %123, %133 in 1 : vector<1x128xf32>, vector<1x128xf32> -> vector<1x256xf32>
    %c0_43 = arith.constant 0 : index
    %c0_44 = arith.constant 0 : index
    %c0_45 = arith.constant 0 : index
    %135 = vector.load %arg6[%c0_43, %c0_44, %c0_45] : memref<1x8x256xf32, #tpu.memory_space<vmem>>, vector<1x8x256xf32>
    %136 = vector.shape_cast %135 : vector<1x8x256xf32> to vector<8x256xf32>
    %137 = vector.shape_cast %111 : vector<8x256xf32> to vector<1x8x256xf32>
    tpu.vector_store %arg6[%c0_43, %c0_44, %c0_45], %137 {strides = array<i32>} : memref<1x8x256xf32, #tpu.memory_space<vmem>>, vector<1x8x256xf32>,
    %c0_46 = arith.constant 0 : index
    %c0_47 = arith.constant 0 : index
    %c0_48 = arith.constant 0 : index
    %138 = vector.load %arg6[%c0_46, %c0_47, %c0_48] : memref<1x8x256xf32, #tpu.memory_space<vmem>>, vector<1x1x256xf32>
    %139 = vector.shape_cast %138 : vector<1x1x256xf32> to vector<1x256xf32>
    %140 = vector.shape_cast %134 : vector<1x256xf32> to vector<1x1x256xf32>
    tpu.vector_store %arg6[%c0_46, %c0_47, %c0_48], %140 {strides = array<i32>} : memref<1x8x256xf32, #tpu.memory_space<vmem>>, vector<1x1x256xf32>,
    return
  }
  func.func @transform_0(%arg0: i32) -> (i32, i32, i32) {
    %c0_i32 = arith.constant 0 : i32
    %c0_i32_0 = arith.constant 0 : i32
    %c0_i32_1 = arith.constant 0 : i32
    return %arg0, %c0_i32, %c0_i32_0 : i32, i32, i32
  }
  func.func @transform_1(%arg0: i32) -> (i32, i32) {
    %c0_i32 = arith.constant 0 : i32
    %c0_i32_0 = arith.constant 0 : i32
    %c0_i32_1 = arith.constant 0 : i32
    return %c0_i32, %c0_i32_0 : i32, i32
  }
  func.func @transform_2(%arg0: i32) -> (i32, i32) {
    %c0_i32 = arith.constant 0 : i32
    %c0_i32_0 = arith.constant 0 : i32
    %c0_i32_1 = arith.constant 0 : i32
    return %c0_i32, %c0_i32_0 : i32, i32
  }
  func.func @transform_3(%arg0: i32) -> (i32, i32) {
    %c0_i32 = arith.constant 0 : i32
    %c0_i32_0 = arith.constant 0 : i32
    %c0_i32_1 = arith.constant 0 : i32
    return %c0_i32, %c0_i32_0 : i32, i32
  }
  func.func @transform_4(%arg0: i32) -> (i32, i32) {
    %c0_i32 = arith.constant 0 : i32
    %c0_i32_0 = arith.constant 0 : i32
    %c0_i32_1 = arith.constant 0 : i32
    return %c0_i32, %c0_i32_0 : i32, i32
  }
  func.func @transform_5(%arg0: i32) -> (i32, i32, i32) {
    %c0_i32 = arith.constant 0 : i32
    %c0_i32_0 = arith.constant 0 : i32
    %c0_i32_1 = arith.constant 0 : i32
    return %arg0, %c0_i32, %c0_i32_0 : i32, i32, i32
  }
}

</mosaic_0001>

<llo_original>
// kernel: target_pred_pallas.1
$region0: #{target_pred_pallas.1}
  #allocation0 [shape = 'u32[]', space=smem, size = 0x4, offset = 0x4, fixed_abs, tag = 'smem constant byte address 0x4 - core index']
  #allocation1 [shape = 'u32[144,128]{1,0:T(1,128)}', space=vmem, size = 0x12000, scoped, tag = 'internal scratch']
  %s0 = inlined_call_operand.vmem [shape: bf16[2,16,256], index: 0, kind: input, shape index: {}]
  %s1 = inlined_call_operand.vmem [shape: bf16[64,16], index: 1, kind: input, shape index: {}]
  %s2 = inlined_call_operand.vmem [shape: bf16[64,64], index: 2, kind: input, shape index: {}]
  %s3 = inlined_call_operand.vmem [shape: bf16[8,64], index: 3, kind: input, shape index: {}]
  %s4 = inlined_call_operand.vmem [shape: f32[64,8], index: 4, kind: input, shape index: {}]
  %s5 = inlined_call_operand.vmem [shape: f32[2,8,256], index: 5, kind: output, shape index: {}]
  %s6 = sld [smem:[#allocation0]]
  $region53: #{target_pred_pallas.1} parent=0
    _
  %s8 = ssub.s32 1, %s6
  %s9 = scalar_select 0, %s8, %s6
  loop: start=0, step=1, limit=4
  $region2: #{target_pred_pallas.1} parent=0 // loop_pre_header
    _
  $region3: #{target_pred_pallas.1} parent=0 // loop_header
    %s11 = sphi 0, %s15
    %p12 = scmp.ge.s32.totalorder %s11, 4
    %s21 = sphi 0, %s23
    %s24 = sphi 0, %s21
    %s25 = sphi 0, %s24
    %s41 = sphi 0, %s25
    %s45 = sphi 0, %s45
    %s47 = sphi 0, %s45
    %s48 = sphi 0, %s47
    %s62 = sphi 0, %s48
    %s66 = sphi 0, %s66
    %s68 = sphi 0, %s66
    %s69 = sphi 0, %s68
    %s83 = sphi 0, %s69
    %s87 = sphi 0, %s87
    %s89 = sphi 0, %s87
    %s90 = sphi 0, %s89
    %s104 = sphi 0, %s90
    %s108 = sphi 0, %s108
    %s110 = sphi 0, %s108
    %s111 = sphi 0, %s110
    %s125 = sphi 0, %s111
    %s131 = sphi 0, %s133
    %s134 = sphi 0, %s131
    %s135 = sphi 0, %s134
    %s151 = sphi 0, %s135
  $region4: #{target_pred_pallas.1} parent=0 // loop_header_branch
    %14 = sbr.rel (%p12) target = $region8
  $region5: #{target_pred_pallas.1} parent=0 // loop_body
    %s16 = ssub.s32 %s11, 1
    %s17 = ssub.s32 %s11, 2
    %s18 = sadd.s32 %s11, 1
    %s19 = ssub.s32 %s11, %s18
    %p20 = scmp.eq.s32.totalorder %s19, 0
    %s22 = sadd.s32 %s21, 1
    %s23 = scalar_select %p20, %s21, %s22
    %p26 = pneg %p20
    %p27 = scmp.eq.s32.totalorder %s11, 1
    %p28 = por %p26, %p27
    %p29 = scmp.ne.s32.totalorder %s21, %s24
    %p30 = scmp.eq.s32.totalorder %s11, 0
    %p31 = por %p29, %p30
    %p32 = scmp.ne.s32.totalorder %s21, %s24
    %p33 = scmp.eq.s32.totalorder %s16, 1
    %p34 = por %p32, %p33
    %p35 = scmp.ne.s32.totalorder %s24, %s25
    %p36 = scmp.eq.s32.totalorder %s16, 0
    %p37 = por %p35, %p36
    %p38 = scmp.ne.s32.totalorder %s24, %s25
    %p39 = scmp.eq.s32.totalorder %s17, 1
    %p40 = por %p38, %p39
    %p42 = scmp.ne.s32.totalorder %s25, %s41
    %p43 = scmp.eq.s32.totalorder %s17, 0
    %p44 = por %p42, %p43
    %s46 = sadd.s32 %s45, 1
    %p49 = scmp.eq.s32.totalorder %s11, 1
    %p50 = scmp.ne.s32.totalorder %s45, %s47
    %p51 = scmp.eq.s32.totalorder %s11, 0
    %p52 = por %p50, %p51
    %p53 = scmp.ne.s32.totalorder %s45, %s47
    %p54 = scmp.eq.s32.totalorder %s16, 1
    %p55 = por %p53, %p54
    %p56 = scmp.ne.s32.totalorder %s47, %s48
    %p57 = scmp.eq.s32.totalorder %s16, 0
    %p58 = por %p56, %p57
    %p59 = scmp.ne.s32.totalorder %s47, %s48
    %p60 = scmp.eq.s32.totalorder %s17, 1
    %p61 = por %p59, %p60
    %p63 = scmp.ne.s32.totalorder %s48, %s62
    %p64 = scmp.eq.s32.totalorder %s17, 0
    %p65 = por %p63, %p64
    %s67 = sadd.s32 %s66, 1
    %p70 = scmp.eq.s32.totalorder %s11, 1
    %p71 = scmp.ne.s32.totalorder %s66, %s68
    %p72 = scmp.eq.s32.totalorder %s11, 0
    %p73 = por %p71, %p72
    %p74 = scmp.ne.s32.totalorder %s66, %s68
    %p75 = scmp.eq.s32.totalorder %s16, 1
    %p76 = por %p74, %p75
    %p77 = scmp.ne.s32.totalorder %s68, %s69
    %p78 = scmp.eq.s32.totalorder %s16, 0
    %p79 = por %p77, %p78
    %p80 = scmp.ne.s32.totalorder %s68, %s69
    %p81 = scmp.eq.s32.totalorder %s17, 1
    %p82 = por %p80, %p81
    %p84 = scmp.ne.s32.totalorder %s69, %s83
    %p85 = scmp.eq.s32.totalorder %s17, 0
    %p86 = por %p84, %p85
    %s88 = sadd.s32 %s87, 1
    %p91 = scmp.eq.s32.totalorder %s11, 1
    %p92 = scmp.ne.s32.totalorder %s87, %s89
    %p93 = scmp.eq.s32.totalorder %s11, 0
    %p94 = por %p92, %p93
    %p95 = scmp.ne.s32.totalorder %s87, %s89
    %p96 = scmp.eq.s32.totalorder %s16, 1
    %p97 = por %p95, %p96
    %p98 = scmp.ne.s32.totalorder %s89, %s90
    %p99 = scmp.eq.s32.totalorder %s16, 0
    %p100 = por %p98, %p99
    %p101 = scmp.ne.s32.totalorder %s89, %s90
    %p102 = scmp.eq.s32.totalorder %s17, 1
    %p103 = por %p101, %p102
    %p105 = scmp.ne.s32.totalorder %s90, %s104
    %p106 = scmp.eq.s32.totalorder %s17, 0
    %p107 = por %p105, %p106
    %s109 = sadd.s32 %s108, 1
    %p112 = scmp.eq.s32.totalorder %s11, 1
    %p113 = scmp.ne.s32.totalorder %s108, %s110
    %p114 = scmp.eq.s32.totalorder %s11, 0
    %p115 = por %p113, %p114
    %p116 = scmp.ne.s32.totalorder %s108, %s110
    %p117 = scmp.eq.s32.totalorder %s16, 1
    %p118 = por %p116, %p117
    %p119 = scmp.ne.s32.totalorder %s110, %s111
    %p120 = scmp.eq.s32.totalorder %s16, 0
    %p121 = por %p119, %p120
    %p122 = scmp.ne.s32.totalorder %s110, %s111
    %p123 = scmp.eq.s32.totalorder %s17, 1
    %p124 = por %p122, %p123
    %p126 = scmp.ne.s32.totalorder %s111, %s125
    %p127 = scmp.eq.s32.totalorder %s17, 0
    %p128 = por %p126, %p127
    %s129 = ssub.s32 %s11, %s18
    %p130 = scmp.eq.s32.totalorder %s129, 0
    %s132 = sadd.s32 %s131, 1
    %s133 = scalar_select %p130, %s131, %s132
    %p136 = pneg %p130
    %p137 = scmp.eq.s32.totalorder %s11, 1
    %p138 = por %p136, %p137
    %p139 = scmp.ne.s32.totalorder %s131, %s134
    %p140 = scmp.eq.s32.totalorder %s11, 0
    %p141 = por %p139, %p140
    %p142 = scmp.ne.s32.totalorder %s131, %s134
    %p143 = scmp.eq.s32.totalorder %s16, 1
    %p144 = por %p142, %p143
    %p145 = scmp.ne.s32.totalorder %s134, %s135
    %p146 = scmp.eq.s32.totalorder %s16, 0
    %p147 = por %p145, %p146
    %p148 = scmp.ne.s32.totalorder %s134, %s135
    %p149 = scmp.eq.s32.totalorder %s17, 1
    %p150 = por %p148, %p149
    %p152 = scmp.ne.s32.totalorder %s135, %s151
    %p153 = scmp.eq.s32.totalorder %s17, 0
    %p154 = por %p152, %p153
    %p155 = scmp.le.s32.totalorder 1, %s11
    %p156 = scmp.lt.s32.totalorder %s11, 3
    %p157 = pnand %p155, %p156
    %p158 = pneg %p157
    // Predicated region
    $region9: #{target_pred_pallas.1} parent=5 // pred_check
      _
    $region10: #{target_pred_pallas.1} parent=5 // pred_check_branch
      %160 = sbr.rel (%p157) target = $region12
    $region11: #{target_pred_pallas.1} parent=5 // pred_region
      %s161 = ssub.s32 %s11, 1
      // Predicated region
      $region13: #{target_pred_pallas.1} parent=11 // pred_check
        %p162 = pneg %p58
      $region14: #{target_pred_pallas.1} parent=11 // pred_check_branch
        %164 = sbr.rel (%p162) target = $region16
      $region15: #{target_pred_pallas.1} parent=11 // pred_region
        _
      $region16: #{target_pred_pallas.1} parent=11 // pred_fallthru
        _
      // Predicated region
      $region17: #{target_pred_pallas.1} parent=11 // pred_check
        %p165 = pneg %p79
      $region18: #{target_pred_pallas.1} parent=11 // pred_check_branch
        %167 = sbr.rel (%p165) target = $region20
      $region19: #{target_pred_pallas.1} parent=11 // pred_region
        _
      $region20: #{target_pred_pallas.1} parent=11 // pred_fallthru
        _
      // Predicated region
      $region21: #{target_pred_pallas.1} parent=11 // pred_check
        %p168 = pneg %p100
      $region22: #{target_pred_pallas.1} parent=11 // pred_check_branch
        %170 = sbr.rel (%p168) target = $region24
      $region23: #{target_pred_pallas.1} parent=11 // pred_region
        _
      $region24: #{target_pred_pallas.1} parent=11 // pred_fallthru
        _
      // Predicated region
      $region25: #{target_pred_pallas.1} parent=11 // pred_check
        %p171 = pneg %p121
      $region26: #{target_pred_pallas.1} parent=11 // pred_check_branch
        %173 = sbr.rel (%p171) target = $region28
      $region27: #{target_pred_pallas.1} parent=11 // pred_region
        _
      $region28: #{target_pred_pallas.1} parent=11 // pred_fallthru
        _
    $region12: #{target_pred_pallas.1} parent=5 // pred_fallthru
      _
    %p174 = scmp.lt.s32.totalorder %s11, 2
    // Predicated region
    $region29: #{target_pred_pallas.1} parent=5 // pred_check
      %p175 = pneg %p174
    $region30: #{target_pred_pallas.1} parent=5 // pred_check_branch
      %177 = sbr.rel (%p175) target = $region32
    $region31: #{target_pred_pallas.1} parent=5 // pred_region
      // Predicated region
      $region33: #{target_pred_pallas.1} parent=31 // pred_check
        %p178 = pneg %p31
      $region34: #{target_pred_pallas.1} parent=31 // pred_check_branch
        %180 = sbr.rel (%p178) target = $region36
      $region35: #{target_pred_pallas.1} parent=31 // pred_region
        %p181 = scmp.lt.s32.totalorder %s11, 1
        %s182 = scalar_select %p181, %s11, 1
        %s183 = smul.addr %s182, 4
        %s184 = smul.addr %s183, 4
        %s185 = scalar_lea.vmem %s0, %s184
      $region36: #{target_pred_pallas.1} parent=31 // pred_fallthru
        _
    $region32: #{target_pred_pallas.1} parent=5 // pred_fallthru
      _
    %p186 = scmp.le.s32.totalorder 1, %s11
    %p187 = scmp.lt.s32.totalorder %s11, 3
    %p188 = pnand %p186, %p187
    %p189 = pneg %p188
    // Predicated region
    $region37: #{target_pred_pallas.1} parent=5 // pred_check
      _
    $region38: #{target_pred_pallas.1} parent=5 // pred_check_branch
      %191 = sbr.rel (%p188) target = $region40
    $region39: #{target_pred_pallas.1} parent=5 // pred_region
      %s192 = ssub.s32 %s11, 1
      %p193 = scmp.lt.s32.totalorder %s16, 1
      %s194 = scalar_select %p193, %s16, 1
      %s195 = smul.addr %s194, 4
      %s196 = smul.addr %s195, 4
      %s197 = scalar_lea.vmem %s0, %s196
      %p198 = pneg %p37
      %p199 = pneg %p34
      %p200 = pneg %p58
      %p201 = pneg %p55
      %p202 = pneg %p79
      %p203 = pneg %p76
      %p204 = pneg %p100
      %p205 = pneg %p97
      %p206 = pneg %p121
      %p207 = pneg %p118
      %p208 = pneg %p147
      %p209 = pneg %p144
      %p210 = scmp.lt.s32.totalorder %s16, 1
      %s211 = scalar_select %p210, %s16, 1
      %s212 = smul.addr %s211, 2
      %s213 = smul.addr %s212, 8
      %s214 = scalar_lea.vmem %s5, %s213
      %p215 = scmp.lt.s32.totalorder %s16, 1
      %s216 = scalar_select %p215, %s16, 1
      %s217 = smul.addr %s216, 4
      %s218 = smul.addr %s217, 4
      %s219 = scalar_lea.vmem %s0, %s218
      %p220 = scmp.lt.s32.totalorder %s16, 1
      %s221 = scalar_select %p220, %s16, 1
      %s222 = smul.addr %s221, 2
      %s223 = smul.addr %s222, 8
      %s224 = scalar_lea.vmem %s5, %s223
      %v226 = vld [vmem:[%s219] sm:$0xff]
      %v227 = vld [vmem:[%s219 + $0x8] sm:$0xff]
      %v228 = vunpack.c.l.bf16 %v226
      %v229 = vunpack.c.h.bf16 %v226
      %v230 = vld [vmem:[%s4] sm:$0xff]
      %v231 = vld [vmem:[%s4 + $0x8] sm:$0xff]
      %v232 = vld [vmem:[%s4 + $0x10] sm:$0xff]
      %v233 = vld [vmem:[%s4 + $0x18] sm:$0xff]
      %v234 = vld [vmem:[%s4 + $0x20] sm:$0xff]
      %v235 = vld [vmem:[%s4 + $0x28] sm:$0xff]
      %v236 = vld [vmem:[%s4 + $0x30] sm:$0xff]
      %v237 = vld [vmem:[%s4 + $0x38] sm:$0xff]
      %v238 = vld [vmem:[%s1] sm:$0xf]
      %v239 = vld [vmem:[%s1 + $0x4] sm:$0xf]
      %v240 = vld [vmem:[%s1 + $0x8] sm:$0xf]
      %v241 = vld [vmem:[%s1 + $0xc] sm:$0xf]
      %v242 = vld [vmem:[%s1 + $0x10] sm:$0xf]
      %v243 = vld [vmem:[%s1 + $0x14] sm:$0xf]
      %v244 = vld [vmem:[%s1 + $0x18] sm:$0xf]
      %v245 = vld [vmem:[%s1 + $0x1c] sm:$0xf]
      %v254 = vunpack.c.l.b16 %v238
      %v255 = vunpack.c.l.b16 %v239
      %v256 = vunpack.c.l.b16 %v240
      %v257 = vunpack.c.l.b16 %v241
      %v258 = vunpack.c.l.b16 %v242
      %v259 = vunpack.c.l.b16 %v243
      %v260 = vunpack.c.l.b16 %v244
      %v261 = vunpack.c.l.b16 %v245
      %v262 = vpack.c.b16 %v255, %v254
      %v263 = vpack.c.b16 %v257, %v256
      %v264 = vpack.c.b16 %v259, %v258
      %v265 = vpack.c.b16 %v261, %v260
      %v268 = vunpack.c.l.b16 %v226
      %v269 = vunpack.c.h.b16 %v226
      %v270 = vunpack.c.l.b16 %v227
      %v271 = vunpack.c.h.b16 %v227
      %v272 = vpack.c.b16 %v270, %v268
      %v273 = vpack.c.b16 %v271, %v269
      %vm276 = vcmask 130048
      %v278 = vsel %vm276, %v262, 0
      %v281 = vsel %vm276, %v263, 0
      %v284 = vsel %vm276, %v264, 0
      %v287 = vsel %vm276, %v265, 0
      %289 = vmatprep.subr.bf16.mxu0 %v273
      %290 = vmatpush1.bf16.msra.mxu0 %v272
      %291 = vmatprep.subr.bf16.mxu0 0
      %292 = vmatpush1.bf16.msra.mxu0 0
      %293 = vmatprep.subr.bf16.mxu0 0
      %294 = vmatpush1.bf16.msra.mxu0 0
      %295 = vmatprep.subr.bf16.mxu0 0
      %296 = vmatpush1.bf16.msra.mxu0 0
      %297 = vmatprep.subr.bf16.mxu0 0
      %298 = vmatpush1.bf16.msra.mxu0 0
      %299 = vmatprep.subr.bf16.mxu0 0
      %300 = vmatpush1.bf16.msra.mxu0 0
      %301 = vmatprep.subr.bf16.mxu0 0
      %302 = vmatpush1.bf16.msra.mxu0 0
      %303 = vmatprep.subr.bf16.mxu0 0
      %304 = vmatpush1.bf16.msra.mxu0 0
      %305 = vmatprep.subr.bf16.mxu0 0
      %306 = vmatpush1.bf16.msra.mxu0 0
      %307 = vmatprep.subr.bf16.mxu0 0
      %308 = vmatpush1.bf16.msra.mxu0 0
      %309 = vmatprep.subr.bf16.mxu0 0
      %310 = vmatpush1.bf16.msra.mxu0 0
      %311 = vmatprep.subr.bf16.mxu0 0
      %312 = vmatpush1.bf16.msra.mxu0 0
      %313 = vmatprep.subr.bf16.mxu0 0
      %314 = vmatpush1.bf16.msra.mxu0 0
      %315 = vmatprep.subr.bf16.mxu0 0
      %316 = vmatpush1.bf16.msra.mxu0 0
      %317 = vmatprep.subr.bf16.mxu0 0
      %318 = vmatpush1.bf16.msra.mxu0 0
      %319 = vmatprep.subr.bf16.mxu0 0
      %320 = vmatpush1.bf16.msra.mxu0 0
      %321 = vmatprep.mubr.bf16.mxu0 0
      %322 = vmatmul.mubr.bf16.gmra.mrb[0].mxu0 %v278
      %v323 = vpop.f32.mrb[0].mxu0
      %v324 = vadd.f32 0.0, %v323
      %v325 = vpop.f32.mrb[0].mxu0
      %v326 = vadd.f32 0.0, %v325
      %v327 = vpop.f32.mrb[0].mxu0
      %v328 = vadd.f32 0.0, %v327
      %v329 = vpop.f32.mrb[0].mxu0
      %v330 = vadd.f32 0.0, %v329
      %331 = vmatprep.mubr.bf16.mxu0 0
      %332 = vmatmul.mubr.bf16.gmra.mrb[0].mxu0 %v281
      %v333 = vpop.f32.mrb[0].mxu0
      %v334 = vadd.f32 0.0, %v333
      %v335 = vpop.f32.mrb[0].mxu0
      %v336 = vadd.f32 0.0, %v335
      %v337 = vpop.f32.mrb[0].mxu0
      %v338 = vadd.f32 0.0, %v337
      %v339 = vpop.f32.mrb[0].mxu0
      %v340 = vadd.f32 0.0, %v339
      %341 = vmatprep.mubr.bf16.mxu0 0
      %342 = vmatmul.mubr.bf16.gmra.mrb[0].mxu0 %v284
      %v343 = vpop.f32.mrb[0].mxu0
      %v344 = vadd.f32 0.0, %v343
      %v345 = vpop.f32.mrb[0].mxu0
      %v346 = vadd.f32 0.0, %v345
      %v347 = vpop.f32.mrb[0].mxu0
      %v348 = vadd.f32 0.0, %v347
      %v349 = vpop.f32.mrb[0].mxu0
      %v350 = vadd.f32 0.0, %v349
      %351 = vmatprep.mubr.bf16.mxu0 0
      %352 = vmatmul.mubr.bf16.gmra.mrb[0].mxu0 %v287
      %v353 = vpop.f32.mrb[0].mxu0
      %v354 = vadd.f32 0.0, %v353
      %v355 = vpop.f32.mrb[0].mxu0
      %v356 = vadd.f32 0.0, %v355
      %v357 = vpop.f32.mrb[0].mxu0
      %v358 = vadd.f32 0.0, %v357
      %v359 = vpop.f32.mrb[0].mxu0
      %v360 = vadd.f32 0.0, %v359
      %361 = vdwg.mxu0
      %v362 = vadd.f32 %v324, %v328
      %v363 = vadd.f32 %v362, %v334
      %v364 = vadd.f32 %v363, %v338
      %v365 = vrot.slane %v364, 4
      %v366 = vadd.f32 %v364, %v365
      %v367 = vrot.slane %v366, 2
      %v368 = vadd.f32 %v366, %v367
      %v369 = vrot.slane %v368, 1
      %v370 = vadd.f32 %v368, %v369
      %v371 = vadd.f32 %v326, %v330
      %v372 = vadd.f32 %v371, %v336
      %v373 = vadd.f32 %v372, %v340
      %v374 = vrot.slane %v373, 4
      %v375 = vadd.f32 %v373, %v374
      %v376 = vrot.slane %v375, 2
      %v377 = vadd.f32 %v375, %v376
      %v378 = vrot.slane %v377, 1
      %v379 = vadd.f32 %v377, %v378
      %v380 = vrcp.pop 32.0
      %v381 = vmul.f32 %v370, %v380
      %v382 = vmul.f32 %v379, %v380
      %v383 = vmul.f32 %v324, %v324
      %v384 = vmul.f32 %v326, %v326
      %v385 = vmul.f32 %v328, %v328
      %v386 = vmul.f32 %v330, %v330
      %v387 = vmul.f32 %v334, %v334
      %v388 = vmul.f32 %v336, %v336
      %v389 = vmul.f32 %v338, %v338
      %v390 = vmul.f32 %v340, %v340
      %v391 = vadd.f32 %v383, %v385
      %v392 = vadd.f32 %v391, %v387
      %v393 = vadd.f32 %v392, %v389
      %v394 = vrot.slane %v393, 4
      %v395 = vadd.f32 %v393, %v394
      %v396 = vrot.slane %v395, 2
      %v397 = vadd.f32 %v395, %v396
      %v398 = vrot.slane %v397, 1
      %v399 = vadd.f32 %v397, %v398
      %v400 = vadd.f32 %v384, %v386
      %v401 = vadd.f32 %v400, %v388
      %v402 = vadd.f32 %v401, %v390
      %v403 = vrot.slane %v402, 4
      %v404 = vadd.f32 %v402, %v403
      %v405 = vrot.slane %v404, 2
      %v406 = vadd.f32 %v404, %v405
      %v407 = vrot.slane %v406, 1
      %v408 = vadd.f32 %v406, %v407
      %v409 = vmul.f32 %v399, %v380
      %v410 = vmul.f32 %v408, %v380
      %v411 = vmul.f32 %v381, %v381
      %v412 = vmul.f32 %v382, %v382
      %v413 = vsub.f32 %v409, %v411
      %v414 = vsub.f32 %v410, %v412
      %v415 = vsub.f32 %v324, %v381
      %v416 = vsub.f32 %v326, %v382
      %v417 = vsub.f32 %v328, %v381
      %v418 = vsub.f32 %v330, %v382
      %v419 = vsub.f32 %v334, %v381
      %v420 = vsub.f32 %v336, %v382
      %v421 = vsub.f32 %v338, %v381
      %v422 = vsub.f32 %v340, %v382
      %v423 = vadd.f32 %v413, 1e-05
      %v424 = vadd.f32 %v414, 1e-05
      %v425 = vrsqrt.pop %v423
      %v426 = vrsqrt.pop %v424
      %v427 = vmul.f32 %v415, %v425
      %v428 = vmul.f32 %v416, %v426
      %v429 = vmul.f32 %v417, %v425
      %v430 = vmul.f32 %v418, %v426
      %v431 = vmul.f32 %v419, %v425
      %v432 = vmul.f32 %v420, %v426
      %v433 = vmul.f32 %v421, %v425
      %v434 = vmul.f32 %v422, %v426
      %v435 = vadd.f32 %v344, %v348
      %v436 = vadd.f32 %v435, %v354
      %v437 = vadd.f32 %v436, %v358
      %v438 = vrot.slane %v437, 4
      %v439 = vadd.f32 %v437, %v438
      %v440 = vrot.slane %v439, 2
      %v441 = vadd.f32 %v439, %v440
      %v442 = vrot.slane %v441, 1
      %v443 = vadd.f32 %v441, %v442
      %v444 = vadd.f32 %v346, %v350
      %v445 = vadd.f32 %v444, %v356
      %v446 = vadd.f32 %v445, %v360
      %v447 = vrot.slane %v446, 4
      %v448 = vadd.f32 %v446, %v447
      %v449 = vrot.slane %v448, 2
      %v450 = vadd.f32 %v448, %v449
      %v451 = vrot.slane %v450, 1
      %v452 = vadd.f32 %v450, %v451
      %v453 = vmul.f32 %v443, %v380
      %v454 = vmul.f32 %v452, %v380
      %v455 = vmul.f32 %v344, %v344
      %v456 = vmul.f32 %v346, %v346
      %v457 = vmul.f32 %v348, %v348
      %v458 = vmul.f32 %v350, %v350
      %v459 = vmul.f32 %v354, %v354
      %v460 = vmul.f32 %v356, %v356
      %v461 = vmul.f32 %v358, %v358
      %v462 = vmul.f32 %v360, %v360
      %v463 = vadd.f32 %v455, %v457
      %v464 = vadd.f32 %v463, %v459
      %v465 = vadd.f32 %v464, %v461
      %v466 = vrot.slane %v465, 4
      %v467 = vadd.f32 %v465, %v466
      %v468 = vrot.slane %v467, 2
      %v469 = vadd.f32 %v467, %v468
      %v470 = vrot.slane %v469, 1
      %v471 = vadd.f32 %v469, %v470
      %v472 = vadd.f32 %v456, %v458
      %v473 = vadd.f32 %v472, %v460
      %v474 = vadd.f32 %v473, %v462
      %v475 = vrot.slane %v474, 4
      %v476 = vadd.f32 %v474, %v475
      %v477 = vrot.slane %v476, 2
      %v478 = vadd.f32 %v476, %v477
      %v479 = vrot.slane %v478, 1
      %v480 = vadd.f32 %v478, %v479
      %v481 = vmul.f32 %v471, %v380
      %v482 = vmul.f32 %v480, %v380
      %v483 = vmul.f32 %v453, %v453
      %v484 = vmul.f32 %v454, %v454
      %v485 = vsub.f32 %v481, %v483
      %v486 = vsub.f32 %v482, %v484
      %v487 = vsub.f32 %v344, %v453
      %v488 = vsub.f32 %v346, %v454
      %v489 = vsub.f32 %v348, %v453
      %v490 = vsub.f32 %v350, %v454
      %v491 = vsub.f32 %v354, %v453
      %v492 = vsub.f32 %v356, %v454
      %v493 = vsub.f32 %v358, %v453
      %v494 = vsub.f32 %v360, %v454
      %v495 = vadd.f32 %v485, 1e-05
      %v496 = vadd.f32 %v486, 1e-05
      %v497 = vrsqrt.pop %v495
      %v498 = vrsqrt.pop %v496
      %v499 = vmul.f32 %v487, %v497
      %v500 = vmul.f32 %v488, %v498
      %v501 = vmul.f32 %v489, %v497
      %v502 = vmul.f32 %v490, %v498
      %v503 = vmul.f32 %v491, %v497
      %v504 = vmul.f32 %v492, %v498
      %v505 = vmul.f32 %v493, %v497
      %v506 = vmul.f32 %v494, %v498
      %508 = vset.pattern.permute.xlu0 0
      %509 = vperm.xlu0 %508, %v230
      %v510 = vpop.permute.xlu0 %509
      %513 = vset.pattern.permute.xlu0 0
      %514 = vperm.xlu0 %513, %v231
      %v515 = vpop.permute.xlu0 %514
      %518 = vset.pattern.permute.xlu0 0
      %519 = vperm.xlu0 %518, %v232
      %v520 = vpop.permute.xlu0 %519
      %523 = vset.pattern.permute.xlu0 0
      %524 = vperm.xlu0 %523, %v233
      %v525 = vpop.permute.xlu0 %524
      %528 = vset.pattern.permute.xlu0 0
      %529 = vperm.xlu0 %528, %v234
      %v530 = vpop.permute.xlu0 %529
      %533 = vset.pattern.permute.xlu0 0
      %534 = vperm.xlu0 %533, %v235
      %v535 = vpop.permute.xlu0 %534
      %538 = vset.pattern.permute.xlu0 0
      %539 = vperm.xlu0 %538, %v236
      %v540 = vpop.permute.xlu0 %539
      %543 = vset.pattern.permute.xlu0 0
      %544 = vperm.xlu0 %543, %v237
      %v545 = vpop.permute.xlu0 %544
      %v547 = vmul.f32 %v427, %v510
      %v548 = vmul.f32 %v428, %v510
      %v549 = vmul.f32 %v429, %v515
      %v550 = vmul.f32 %v430, %v515
      %v551 = vmul.f32 %v431, %v520
      %v552 = vmul.f32 %v432, %v520
      %v553 = vmul.f32 %v433, %v525
      %v554 = vmul.f32 %v434, %v525
      %v555 = vmul.f32 %v499, %v530
      %v556 = vmul.f32 %v500, %v530
      %v557 = vmul.f32 %v501, %v535
      %v558 = vmul.f32 %v502, %v535
      %v559 = vmul.f32 %v503, %v540
      %v560 = vmul.f32 %v504, %v540
      %v561 = vmul.f32 %v505, %v545
      %v562 = vmul.f32 %v506, %v545
      %563 = vset.pattern.permute.xlu0 1
      %564 = vperm.xlu0 %563, %v230
      %v565 = vpop.permute.xlu0 %564
      %567 = vset.pattern.permute.xlu0 1
      %568 = vperm.xlu0 %567, %v231
      %v569 = vpop.permute.xlu0 %568
      %571 = vset.pattern.permute.xlu0 1
      %572 = vperm.xlu0 %571, %v232
      %v573 = vpop.permute.xlu0 %572
      %575 = vset.pattern.permute.xlu0 1
      %576 = vperm.xlu0 %575, %v233
      %v577 = vpop.permute.xlu0 %576
      %579 = vset.pattern.permute.xlu0 1
      %580 = vperm.xlu0 %579, %v234
      %v581 = vpop.permute.xlu0 %580
      %583 = vset.pattern.permute.xlu0 1
      %584 = vperm.xlu0 %583, %v235
      %v585 = vpop.permute.xlu0 %584
      %587 = vset.pattern.permute.xlu0 1
      %588 = vperm.xlu0 %587, %v236
      %v589 = vpop.permute.xlu0 %588
      %591 = vset.pattern.permute.xlu0 1
      %592 = vperm.xlu0 %591, %v237
      %v593 = vpop.permute.xlu0 %592
      %v595 = vadd.f32 %v547, %v565
      %v596 = vadd.f32 %v548, %v565
      %v597 = vadd.f32 %v549, %v569
      %v598 = vadd.f32 %v550, %v569
      %v599 = vadd.f32 %v551, %v573
      %v600 = vadd.f32 %v552, %v573
      %v601 = vadd.f32 %v553, %v577
      %v602 = vadd.f32 %v554, %v577
      %v603 = vadd.f32 %v555, %v581
      %v604 = vadd.f32 %v556, %v581
      %v605 = vadd.f32 %v557, %v585
      %v606 = vadd.f32 %v558, %v585
      %v607 = vadd.f32 %v559, %v589
      %v608 = vadd.f32 %v560, %v589
      %v609 = vadd.f32 %v561, %v593
      %v610 = vadd.f32 %v562, %v593
      %v611 = vmax.f32 %v595, 0.0
      %v612 = vmax.f32 %v596, 0.0
      %v613 = vmax.f32 %v597, 0.0
      %v614 = vmax.f32 %v598, 0.0
      %v615 = vmax.f32 %v599, 0.0
      %v616 = vmax.f32 %v600, 0.0
      %v617 = vmax.f32 %v601, 0.0
      %v618 = vmax.f32 %v602, 0.0
      %v619 = vmax.f32 %v603, 0.0
      %v620 = vmax.f32 %v604, 0.0
      %v621 = vmax.f32 %v605, 0.0
      %v622 = vmax.f32 %v606, 0.0
      %v623 = vmax.f32 %v607, 0.0
      %v624 = vmax.f32 %v608, 0.0
      %v625 = vmax.f32 %v609, 0.0
      %v626 = vmax.f32 %v610, 0.0
      %v627 = vld [vmem:[%s2] sm:$0xf]
      %v628 = vld [vmem:[%s2 + $0x4] sm:$0xf]
      %v629 = vld [vmem:[%s2 + $0x8] sm:$0xf]
      %v630 = vld [vmem:[%s2 + $0xc] sm:$0xf]
      %v631 = vld [vmem:[%s2 + $0x10] sm:$0xf]
      %v632 = vld [vmem:[%s2 + $0x14] sm:$0xf]
      %v633 = vld [vmem:[%s2 + $0x18] sm:$0xf]
      %v634 = vld [vmem:[%s2 + $0x1c] sm:$0xf]
      %v635 = vpack.c.bf16 %v613, %v611
      %v636 = vpack.c.bf16 %v614, %v612
      %v637 = vpack.c.bf16 %v617, %v615
      %v638 = vpack.c.bf16 %v618, %v616
      %v639 = vpack.c.bf16 %v621, %v619
      %v640 = vpack.c.bf16 %v622, %v620
      %v641 = vpack.c.bf16 %v625, %v623
      %v642 = vpack.c.bf16 %v626, %v624
      %643 = vset.pattern.permute.xlu0 2
      %644 = vperm.xlu0 %643, %v230
      %v645 = vpop.permute.xlu0 %644
      %647 = vset.pattern.permute.xlu0 2
      %648 = vperm.xlu0 %647, %v231
      %v649 = vpop.permute.xlu0 %648
      %651 = vset.pattern.permute.xlu0 2
      %652 = vperm.xlu0 %651, %v232
      %v653 = vpop.permute.xlu0 %652
      %655 = vset.pattern.permute.xlu0 2
      %656 = vperm.xlu0 %655, %v233
      %v657 = vpop.permute.xlu0 %656
      %659 = vset.pattern.permute.xlu0 2
      %660 = vperm.xlu0 %659, %v234
      %v661 = vpop.permute.xlu0 %660
      %663 = vset.pattern.permute.xlu0 2
      %664 = vperm.xlu0 %663, %v235
      %v665 = vpop.permute.xlu0 %664
      %667 = vset.pattern.permute.xlu0 2
      %668 = vperm.xlu0 %667, %v236
      %v669 = vpop.permute.xlu0 %668
      %671 = vset.pattern.permute.xlu0 2
      %672 = vperm.xlu0 %671, %v237
      %v673 = vpop.permute.xlu0 %672
      %v683 = vunpack.c.l.b16 %v627
      %v684 = vunpack.c.l.b16 %v628
      %v685 = vunpack.c.l.b16 %v629
      %v686 = vunpack.c.l.b16 %v630
      %v687 = vunpack.c.l.b16 %v631
      %v688 = vunpack.c.l.b16 %v632
      %v689 = vunpack.c.l.b16 %v633
      %v690 = vunpack.c.l.b16 %v634
      %v691 = vpack.c.b16 %v684, %v683
      %v692 = vpack.c.b16 %v686, %v685
      %v693 = vpack.c.b16 %v688, %v687
      %v694 = vpack.c.b16 %v690, %v689
      %vm695 = vcmask 523264
      %v697 = vsel %vm695, %v691, 0
      %v700 = vsel %vm695, %v692, 0
      %v703 = vsel %vm695, %v693, 0
      %v706 = vsel %vm695, %v694, 0
      %708 = vmatprep.subr.bf16.mxu0 %v636
      %709 = vmatpush1.bf16.msra.mxu0 %v635
      %710 = vmatprep.subr.bf16.mxu0 %v638
      %711 = vmatpush1.bf16.msra.mxu0 %v637
      %712 = vmatprep.subr.bf16.mxu0 %v640
      %713 = vmatpush1.bf16.msra.mxu0 %v639
      %714 = vmatprep.subr.bf16.mxu0 %v642
      %715 = vmatpush1.bf16.msra.mxu0 %v641
      %716 = vmatprep.subr.bf16.mxu0 0
      %717 = vmatpush1.bf16.msra.mxu0 0
      %718 = vmatprep.subr.bf16.mxu0 0
      %719 = vmatpush1.bf16.msra.mxu0 0
      %720 = vmatprep.subr.bf16.mxu0 0
      %721 = vmatpush1.bf16.msra.mxu0 0
      %722 = vmatprep.subr.bf16.mxu0 0
      %723 = vmatpush1.bf16.msra.mxu0 0
      %724 = vmatprep.subr.bf16.mxu0 0
      %725 = vmatpush1.bf16.msra.mxu0 0
      %726 = vmatprep.subr.bf16.mxu0 0
      %727 = vmatpush1.bf16.msra.mxu0 0
      %728 = vmatprep.subr.bf16.mxu0 0
      %729 = vmatpush1.bf16.msra.mxu0 0
      %730 = vmatprep.subr.bf16.mxu0 0
      %731 = vmatpush1.bf16.msra.mxu0 0
      %732 = vmatprep.subr.bf16.mxu0 0
      %733 = vmatpush1.bf16.msra.mxu0 0
      %734 = vmatprep.subr.bf16.mxu0 0
      %735 = vmatpush1.bf16.msra.mxu0 0
      %736 = vmatprep.subr.bf16.mxu0 0
      %737 = vmatpush1.bf16.msra.mxu0 0
      %738 = vmatprep.subr.bf16.mxu0 0
      %739 = vmatpush1.bf16.msra.mxu0 0
      %740 = vmatprep.mubr.bf16.mxu0 0
      %741 = vmatmul.mubr.bf16.gmra.mrb[0].mxu0 %v697
      %v742 = vpop.f32.mrb[0].mxu0
      %v743 = vadd.f32 %v645, %v742
      %v744 = vpop.f32.mrb[0].mxu0
      %v745 = vadd.f32 %v645, %v744
      %v746 = vpop.f32.mrb[0].mxu0
      %v747 = vadd.f32 %v649, %v746
      %v748 = vpop.f32.mrb[0].mxu0
      %v749 = vadd.f32 %v649, %v748
      %750 = vmatprep.mubr.bf16.mxu0 0
      %751 = vmatmul.mubr.bf16.gmra.mrb[0].mxu0 %v700
      %v752 = vpop.f32.mrb[0].mxu0
      %v753 = vadd.f32 %v653, %v752
      %v754 = vpop.f32.mrb[0].mxu0
      %v755 = vadd.f32 %v653, %v754
      %v756 = vpop.f32.mrb[0].mxu0
      %v757 = vadd.f32 %v657, %v756
      %v758 = vpop.f32.mrb[0].mxu0
      %v759 = vadd.f32 %v657, %v758
      %760 = vmatprep.mubr.bf16.mxu0 0
      %761 = vmatmul.mubr.bf16.gmra.mrb[0].mxu0 %v703
      %v762 = vpop.f32.mrb[0].mxu0
      %v763 = vadd.f32 %v661, %v762
      %v764 = vpop.f32.mrb[0].mxu0
      %v765 = vadd.f32 %v661, %v764
      %v766 = vpop.f32.mrb[0].mxu0
      %v767 = vadd.f32 %v665, %v766
      %v768 = vpop.f32.mrb[0].mxu0
      %v769 = vadd.f32 %v665, %v768
      %770 = vmatprep.mubr.bf16.mxu0 0
      %771 = vmatmul.mubr.bf16.gmra.mrb[0].mxu0 %v706
      %v772 = vpop.f32.mrb[0].mxu0
      %v773 = vadd.f32 %v669, %v772
      %v774 = vpop.f32.mrb[0].mxu0
      %v775 = vadd.f32 %v669, %v774
      %v776 = vpop.f32.mrb[0].mxu0
      %v777 = vadd.f32 %v673, %v776
      %v778 = vpop.f32.mrb[0].mxu0
      %v779 = vadd.f32 %v673, %v778
      %780 = vdwg.mxu0
      %v781 = vadd.f32 %v743, %v747
      %v782 = vadd.f32 %v781, %v753
      %v783 = vadd.f32 %v782, %v757
      %v784 = vrot.slane %v783, 4
      %v785 = vadd.f32 %v783, %v784
      %v786 = vrot.slane %v785, 2
      %v787 = vadd.f32 %v785, %v786
      %v788 = vrot.slane %v787, 1
      %v789 = vadd.f32 %v787, %v788
      %v790 = vadd.f32 %v745, %v749
      %v791 = vadd.f32 %v790, %v755
      %v792 = vadd.f32 %v791, %v759
      %v793 = vrot.slane %v792, 4
      %v794 = vadd.f32 %v792, %v793
      %v795 = vrot.slane %v794, 2
      %v796 = vadd.f32 %v794, %v795
      %v797 = vrot.slane %v796, 1
      %v798 = vadd.f32 %v796, %v797
      %v799 = vmul.f32 %v789, %v380
      %v800 = vmul.f32 %v798, %v380
      %v801 = vmul.f32 %v743, %v743
      %v802 = vmul.f32 %v745, %v745
      %v803 = vmul.f32 %v747, %v747
      %v804 = vmul.f32 %v749, %v749
      %v805 = vmul.f32 %v753, %v753
      %v806 = vmul.f32 %v755, %v755
      %v807 = vmul.f32 %v757, %v757
      %v808 = vmul.f32 %v759, %v759
      %v809 = vadd.f32 %v801, %v803
      %v810 = vadd.f32 %v809, %v805
      %v811 = vadd.f32 %v810, %v807
      %v812 = vrot.slane %v811, 4
      %v813 = vadd.f32 %v811, %v812
      %v814 = vrot.slane %v813, 2
      %v815 = vadd.f32 %v813, %v814
      %v816 = vrot.slane %v815, 1
      %v817 = vadd.f32 %v815, %v816
      %v818 = vadd.f32 %v802, %v804
      %v819 = vadd.f32 %v818, %v806
      %v820 = vadd.f32 %v819, %v808
      %v821 = vrot.slane %v820, 4
      %v822 = vadd.f32 %v820, %v821
      %v823 = vrot.slane %v822, 2
      %v824 = vadd.f32 %v822, %v823
      %v825 = vrot.slane %v824, 1
      %v826 = vadd.f32 %v824, %v825
      %v827 = vmul.f32 %v817, %v380
      %v828 = vmul.f32 %v826, %v380
      %v829 = vmul.f32 %v799, %v799
      %v830 = vmul.f32 %v800, %v800
      %v831 = vsub.f32 %v827, %v829
      %v832 = vsub.f32 %v828, %v830
      %v833 = vsub.f32 %v743, %v799
      %v834 = vsub.f32 %v745, %v800
      %v835 = vsub.f32 %v747, %v799
      %v836 = vsub.f32 %v749, %v800
      %v837 = vsub.f32 %v753, %v799
      %v838 = vsub.f32 %v755, %v800
      %v839 = vsub.f32 %v757, %v799
      %v840 = vsub.f32 %v759, %v800
      %v841 = vadd.f32 %v831, 1e-05
      %v842 = vadd.f32 %v832, 1e-05
      %v843 = vrsqrt.pop %v841
      %v844 = vrsqrt.pop %v842
      %v845 = vmul.f32 %v833, %v843
      %v846 = vmul.f32 %v834, %v844
      %v847 = vmul.f32 %v835, %v843
      %v848 = vmul.f32 %v836, %v844
      %v849 = vmul.f32 %v837, %v843
      %v850 = vmul.f32 %v838, %v844
      %v851 = vmul.f32 %v839, %v843
      %v852 = vmul.f32 %v840, %v844
      %v853 = vadd.f32 %v763, %v767
      %v854 = vadd.f32 %v853, %v773
      %v855 = vadd.f32 %v854, %v777
      %v856 = vrot.slane %v855, 4
      %v857 = vadd.f32 %v855, %v856
      %v858 = vrot.slane %v857, 2
      %v859 = vadd.f32 %v857, %v858
      %v860 = vrot.slane %v859, 1
      %v861 = vadd.f32 %v859, %v860
      %v862 = vadd.f32 %v765, %v769
      %v863 = vadd.f32 %v862, %v775
      %v864 = vadd.f32 %v863, %v779
      %v865 = vrot.slane %v864, 4
      %v866 = vadd.f32 %v864, %v865
      %v867 = vrot.slane %v866, 2
      %v868 = vadd.f32 %v866, %v867
      %v869 = vrot.slane %v868, 1
      %v870 = vadd.f32 %v868, %v869
      %v871 = vmul.f32 %v861, %v380
      %v872 = vmul.f32 %v870, %v380
      %v873 = vmul.f32 %v763, %v763
      %v874 = vmul.f32 %v765, %v765
      %v875 = vmul.f32 %v767, %v767
      %v876 = vmul.f32 %v769, %v769
      %v877 = vmul.f32 %v773, %v773
      %v878 = vmul.f32 %v775, %v775
      %v879 = vmul.f32 %v777, %v777
      %v880 = vmul.f32 %v779, %v779
      %v881 = vadd.f32 %v873, %v875
      %v882 = vadd.f32 %v881, %v877
      %v883 = vadd.f32 %v882, %v879
      %v884 = vrot.slane %v883, 4
      %v885 = vadd.f32 %v883, %v884
      %v886 = vrot.slane %v885, 2
      %v887 = vadd.f32 %v885, %v886
      %v888 = vrot.slane %v887, 1
      %v889 = vadd.f32 %v887, %v888
      %v890 = vadd.f32 %v874, %v876
      %v891 = vadd.f32 %v890, %v878
      %v892 = vadd.f32 %v891, %v880
      %v893 = vrot.slane %v892, 4
      %v894 = vadd.f32 %v892, %v893
      %v895 = vrot.slane %v894, 2
      %v896 = vadd.f32 %v894, %v895
      %v897 = vrot.slane %v896, 1
      %v898 = vadd.f32 %v896, %v897
      %v899 = vmul.f32 %v889, %v380
      %v900 = vmul.f32 %v898, %v380
      %v901 = vmul.f32 %v871, %v871
      %v902 = vmul.f32 %v872, %v872
      %v903 = vsub.f32 %v899, %v901
      %v904 = vsub.f32 %v900, %v902
      %v905 = vsub.f32 %v763, %v871
      %v906 = vsub.f32 %v765, %v872
      %v907 = vsub.f32 %v767, %v871
      %v908 = vsub.f32 %v769, %v872
      %v909 = vsub.f32 %v773, %v871
      %v910 = vsub.f32 %v775, %v872
      %v911 = vsub.f32 %v777, %v871
      %v912 = vsub.f32 %v779, %v872
      %v913 = vadd.f32 %v903, 1e-05
      %v914 = vadd.f32 %v904, 1e-05
      %v915 = vrsqrt.pop %v913
      %v916 = vrsqrt.pop %v914
      %v917 = vmul.f32 %v905, %v915
      %v918 = vmul.f32 %v906, %v916
      %v919 = vmul.f32 %v907, %v915
      %v920 = vmul.f32 %v908, %v916
      %v921 = vmul.f32 %v909, %v915
      %v922 = vmul.f32 %v910, %v916
      %v923 = vmul.f32 %v911, %v915
      %v924 = vmul.f32 %v912, %v916
      %925 = vset.pattern.permute.xlu0 3
      %926 = vperm.xlu0 %925, %v230
      %v927 = vpop.permute.xlu0 %926
      %929 = vset.pattern.permute.xlu0 3
      %930 = vperm.xlu0 %929, %v231
      %v931 = vpop.permute.xlu0 %930
      %933 = vset.pattern.permute.xlu0 3
      %934 = vperm.xlu0 %933, %v232
      %v935 = vpop.permute.xlu0 %934
      %937 = vset.pattern.permute.xlu0 3
      %938 = vperm.xlu0 %937, %v233
      %v939 = vpop.permute.xlu0 %938
      %941 = vset.pattern.permute.xlu0 3
      %942 = vperm.xlu0 %941, %v234
      %v943 = vpop.permute.xlu0 %942
      %945 = vset.pattern.permute.xlu0 3
      %946 = vperm.xlu0 %945, %v235
      %v947 = vpop.permute.xlu0 %946
      %949 = vset.pattern.permute.xlu0 3
      %950 = vperm.xlu0 %949, %v236
      %v951 = vpop.permute.xlu0 %950
      %953 = vset.pattern.permute.xlu0 3
      %954 = vperm.xlu0 %953, %v237
      %v955 = vpop.permute.xlu0 %954
      %v957 = vmul.f32 %v845, %v927
      %v958 = vmul.f32 %v846, %v927
      %v959 = vmul.f32 %v847, %v931
      %v960 = vmul.f32 %v848, %v931
      %v961 = vmul.f32 %v849, %v935
      %v962 = vmul.f32 %v850, %v935
      %v963 = vmul.f32 %v851, %v939
      %v964 = vmul.f32 %v852, %v939
      %v965 = vmul.f32 %v917, %v943
      %v966 = vmul.f32 %v918, %v943
      %v967 = vmul.f32 %v919, %v947
      %v968 = vmul.f32 %v920, %v947
      %v969 = vmul.f32 %v921, %v951
      %v970 = vmul.f32 %v922, %v951
      %v971 = vmul.f32 %v923, %v955
      %v972 = vmul.f32 %v924, %v955
      %973 = vset.pattern.permute.xlu0 4
      %974 = vperm.xlu0 %973, %v230
      %v975 = vpop.permute.xlu0 %974
      %977 = vset.pattern.permute.xlu0 4
      %978 = vperm.xlu0 %977, %v231
      %v979 = vpop.permute.xlu0 %978
      %981 = vset.pattern.permute.xlu0 4
      %982 = vperm.xlu0 %981, %v232
      %v983 = vpop.permute.xlu0 %982
      %985 = vset.pattern.permute.xlu0 4
      %986 = vperm.xlu0 %985, %v233
      %v987 = vpop.permute.xlu0 %986
      %989 = vset.pattern.permute.xlu0 4
      %990 = vperm.xlu0 %989, %v234
      %v991 = vpop.permute.xlu0 %990
      %993 = vset.pattern.permute.xlu0 4
      %994 = vperm.xlu0 %993, %v235
      %v995 = vpop.permute.xlu0 %994
      %997 = vset.pattern.permute.xlu0 4
      %998 = vperm.xlu0 %997, %v236
      %v999 = vpop.permute.xlu0 %998
      %1001 = vset.pattern.permute.xlu0 4
      %1002 = vperm.xlu0 %1001, %v237
      %v1003 = vpop.permute.xlu0 %1002
      %v1005 = vadd.f32 %v957, %v975
      %v1006 = vadd.f32 %v958, %v975
      %v1007 = vadd.f32 %v959, %v979
      %v1008 = vadd.f32 %v960, %v979
      %v1009 = vadd.f32 %v961, %v983
      %v1010 = vadd.f32 %v962, %v983
      %v1011 = vadd.f32 %v963, %v987
      %v1012 = vadd.f32 %v964, %v987
      %v1013 = vadd.f32 %v965, %v991
      %v1014 = vadd.f32 %v966, %v991
      %v1015 = vadd.f32 %v967, %v995
      %v1016 = vadd.f32 %v968, %v995
      %v1017 = vadd.f32 %v969, %v999
      %v1018 = vadd.f32 %v970, %v999
      %v1019 = vadd.f32 %v971, %v1003
      %v1020 = vadd.f32 %v972, %v1003
      %v1021 = vmax.f32 %v1005, 0.0
      %v1022 = vmax.f32 %v1006, 0.0
      %v1023 = vmax.f32 %v1007, 0.0
      %v1024 = vmax.f32 %v1008, 0.0
      %v1025 = vmax.f32 %v1009, 0.0
      %v1026 = vmax.f32 %v1010, 0.0
      %v1027 = vmax.f32 %v1011, 0.0
      %v1028 = vmax.f32 %v1012, 0.0
      %v1029 = vmax.f32 %v1013, 0.0
      %v1030 = vmax.f32 %v1014, 0.0
      %v1031 = vmax.f32 %v1015, 0.0
      %v1032 = vmax.f32 %v1016, 0.0
      %v1033 = vmax.f32 %v1017, 0.0
      %v1034 = vmax.f32 %v1018, 0.0
      %v1035 = vmax.f32 %v1019, 0.0
      %v1036 = vmax.f32 %v1020, 0.0
      %v1037 = vld [vmem:[%s3] sm:$0xf]
      %v1038 = vpack.c.bf16 %v1023, %v1021
      %v1039 = vpack.c.bf16 %v1024, %v1022
      %v1040 = vpack.c.bf16 %v1027, %v1025
      %v1041 = vpack.c.bf16 %v1028, %v1026
      %v1042 = vpack.c.bf16 %v1031, %v1029
      %v1043 = vpack.c.bf16 %v1032, %v1030
      %v1044 = vpack.c.bf16 %v1035, %v1033
      %v1045 = vpack.c.bf16 %v1036, %v1034
      %1046 = vset.pattern.permute.xlu0 5
      %1047 = vperm.xlu0 %1046, %v230
      %v1048 = vpop.permute.xlu0 %1047
      %v1051 = vsel %vm695, %v1037, 0
      %1053 = vmatprep.subr.bf16.mxu0 %v1039
      %1054 = vmatpush1.bf16.msra.mxu0 %v1038
      %1055 = vmatprep.subr.bf16.mxu0 %v1041
      %1056 = vmatpush1.bf16.msra.mxu0 %v1040
      %1057 = vmatprep.subr.bf16.mxu0 %v1043
      %1058 = vmatpush1.bf16.msra.mxu0 %v1042
      %1059 = vmatprep.subr.bf16.mxu0 %v1045
      %1060 = vmatpush1.bf16.msra.mxu0 %v1044
      %1061 = vmatprep.subr.bf16.mxu0 0
      %1062 = vmatpush1.bf16.msra.mxu0 0
      %1063 = vmatprep.subr.bf16.mxu0 0
      %1064 = vmatpush1.bf16.msra.mxu0 0
      %1065 = vmatprep.subr.bf16.mxu0 0
      %1066 = vmatpush1.bf16.msra.mxu0 0
      %1067 = vmatprep.subr.bf16.mxu0 0
      %1068 = vmatpush1.bf16.msra.mxu0 0
      %1069 = vmatprep.subr.bf16.mxu0 0
      %1070 = vmatpush1.bf16.msra.mxu0 0
      %1071 = vmatprep.subr.bf16.mxu0 0
      %1072 = vmatpush1.bf16.msra.mxu0 0
      %1073 = vmatprep.subr.bf16.mxu0 0
      %1074 = vmatpush1.bf16.msra.mxu0 0
      %1075 = vmatprep.subr.bf16.mxu0 0
      %1076 = vmatpush1.bf16.msra.mxu0 0
      %1077 = vmatprep.subr.bf16.mxu0 0
      %1078 = vmatpush1.bf16.msra.mxu0 0
      %1079 = vmatprep.subr.bf16.mxu0 0
      %1080 = vmatpush1.bf16.msra.mxu0 0
      %1081 = vmatprep.subr.bf16.mxu0 0
      %1082 = vmatpush1.bf16.msra.mxu0 0
      %1083 = vmatprep.subr.bf16.mxu0 0
      %1084 = vmatpush1.bf16.msra.mxu0 0
      %1085 = vmatprep.mubr.bf16.mxu0 0
      %1086 = vmatmul.mubr.bf16.gmra.mrb[0].mxu0 %v1051
      %v1087 = vpop.f32.mrb[0].mxu0
      %v1088 = vadd.f32 %v1048, %v1087
      %v1089 = vpop.f32.mrb[0].mxu0
      %v1090 = vadd.f32 %v1048, %v1089
      %v1091 = vpop.f32.mrb[0].mxu0
      %v1092 = vpop.f32.mrb[0].mxu0
      %1093 = vdwg.mxu0
      %v1096 = vrot.slane %v228, 6
      %v1097 = vrot.slane %v229, 6
      %v1100 = vadd.f32 %v1088, %v1096
      %v1101 = vadd.f32 %v1090, %v1097
      %vm1102 = vcmask 1040384
      %v1103 = vsel %vm1102, %v1100, -inf
      %1104 = vmax.xlane.f32.xlu0 %v1103
      %v1105 = vpop.xlane.xlu0 %1104
      %v1106 = vsub.f32 %v1100, %v1105
      %v1107 = vmul.f32 %v1106, 1.442695
      %v1108 = vpow.pop %v1107
      %v1109 = vsel %vm1102, %v1108, 0.0
      %1110 = vadd.xlane.f32.xlu0 %v1109
      %v1111 = vpop.xlane.xlu0 %1110
      %v1112 = vrcp.pop %v1111
      %v1113 = vmul.f32 %v1108, %v1112
      %v1114 = vsel %vm1102, %v1101, -inf
      %1115 = vmax.xlane.f32.xlu0 %v1114
      %v1116 = vpop.xlane.xlu0 %1115
      %v1117 = vsub.f32 %v1101, %v1116
      %v1118 = vmul.f32 %v1117, 1.442695
      %v1119 = vpow.pop %v1118
      %v1120 = vsel %vm1102, %v1119, 0.0
      %1121 = vadd.xlane.f32.xlu0 %v1120
      %v1122 = vpop.xlane.xlu0 %1121
      %v1123 = vrcp.pop %v1122
      %v1124 = vmul.f32 %v1119, %v1123
      %1125 = vst [vmem:[%s224] sm:$0xff] %v1088
      %1126 = vst [vmem:[%s224 + $0x8] sm:$0xff] %v1090
      %v1129 = vcombine.low %v1113, %v1124
      %v1131 = vunpack.c.l.s4 1966171168
      %v1132 = vunpack.c.0.s8 %v1131
      %v1133 = vlaneseq
      %v1134 = vshrl.u32 %v1133, 7
      %v1135 = vsub.s32 %v1132, %v1134
      %v1136 = vrot.slane %v1129, %v1135
      %v1138 = vunpack.c.l.s4 1966171168
      %v1139 = vunpack.c.0.s8 %v1138
      %v1140 = vlaneseq
      %v1141 = vshrl.u32 %v1140, 7
      %v1142 = vsub.s32 %v1139, %v1141
      %v1143 = vrot.slane %v1136, %v1142
      %v1145 = vlaneseq
      %vm1146 = vcmp.ge.s32.totalorder %v1145, 0
      %vm1147 = vcmp.lt.s32.totalorder %v1145, 256
      %vm1148 = vmand %vm1146, %vm1147
      %1149 = vst.msk [vmem:[%s224] ss:$8 sm:$0x3] %vm1148, %v1143
      %1150 = vst.msk [vmem:[%s224] ss:$8 sm:$0x0] %vm1148, %v1143
      %p1151 = scmp.lt.s32.totalorder %s16, 1
      %s1152 = scalar_select %p1151, %s16, 1
      %s1153 = smul.addr %s1152, 2
      %s1154 = smul.addr %s1153, 8
      %s1155 = scalar_lea.vmem %s5, %s1154
      // Predicated region
      $region41: #{target_pred_pallas.1} parent=39 // pred_check
        %p1156 = pneg %p144
      $region42: #{target_pred_pallas.1} parent=39 // pred_check_branch
        %1158 = sbr.rel (%p1156) target = $region44
      $region43: #{target_pred_pallas.1} parent=39 // pred_region
        _
      $region44: #{target_pred_pallas.1} parent=39 // pred_fallthru
        _
    $region40: #{target_pred_pallas.1} parent=5 // pred_fallthru
      _
    %p1159 = scmp.le.s32.totalorder 2, %s11
    // Predicated region
    $region45: #{target_pred_pallas.1} parent=5 // pred_check
      %p1160 = pneg %p1159
    $region46: #{target_pred_pallas.1} parent=5 // pred_check_branch
      %1162 = sbr.rel (%p1160) target = $region48
    $region47: #{target_pred_pallas.1} parent=5 // pred_region
      %s1163 = ssub.s32 %s11, 2
      // Predicated region
      $region49: #{target_pred_pallas.1} parent=47 // pred_check
        %p1164 = pneg %p150
      $region50: #{target_pred_pallas.1} parent=47 // pred_check_branch
        %1166 = sbr.rel (%p1164) target = $region52
      $region51: #{target_pred_pallas.1} parent=47 // pred_region
        %p1167 = scmp.lt.s32.totalorder %s17, 1
        %s1168 = scalar_select %p1167, %s17, 1
        %s1169 = smul.addr %s1168, 2
        %s1170 = smul.addr %s1169, 8
        %s1171 = scalar_lea.vmem %s5, %s1170
      $region52: #{target_pred_pallas.1} parent=47 // pred_fallthru
        _
    $region48: #{target_pred_pallas.1} parent=5 // pred_fallthru
      _
  $region6: #{target_pred_pallas.1} parent=0 // loop_footer
    %s15 = sadd.s32 1, %s11
  $region7: #{target_pred_pallas.1} parent=0 // loop_footer_branch
    %10 = sbr.rel target = $region3
  $region8: #{target_pred_pallas.1} parent=0 // loop_exit
    _

</llo_original>
